<compile_context>
chip_gen: v5e
topology: v5e:2x2
jax: 0.10.0
libtpu: 0.0.40
codegen_flags: <defaults>
</compile_context>

<pallas_src>
import functools

import jax
import jax.numpy as jnp
from jax.experimental import pallas as pl
from jax.experimental.pallas import tpu as pltpu


def _round_up(x, m):
    return ((x + m - 1) // m) * m


def _vmem_capacity_bytes():
    """Physical per-core VMEM; conservative 64 MiB (v7x) fallback."""
    try:
        cap = int(pltpu.get_tpu_info().vmem_capacity_bytes)
        if cap >= (16 << 20):
            return cap
    except Exception:
        pass
    return 64 << 20


def _pick_tile_d(dim, n_batch, itemsize, block_budget):
    """Prefer the full dim (contiguous rows); tile only if a full-dim slab can't fit."""
    if dim % 128 != 0 or n_batch * dim * itemsize <= block_budget:
        return dim
    n128 = dim // 128
    best = 1
    for k in range(1, n128 + 1):
        if n128 % k == 0 and n_batch * 128 * k * itemsize <= block_budget:
            best = k
    return 128 * best


def _pick_t_block(random_times, per_t_bytes, block_budget):
    """Largest divisor of random_times fitting the budget, while keeping >= 2 T tiles
    (when random_times >= 2) so the 'parallel' T axis can shard across v7x's 2 TCs."""
    t_block = 1
    for tb in range(1, random_times + 1):
        if random_times % tb != 0:
            continue
        if tb * per_t_bytes > block_budget:
            continue
        if random_times >= 2 and random_times // tb < 2:
            continue
        t_block = tb
    return t_block


def _noise_proto_fix_kernel(avg_ref, proto_ref, noise_ref, out_ref, *acc,
                            t_block, d_tiles, unroll):
    proto = proto_ref[...].astype(jnp.float32)       # (n_ways, tile_d) — tiny, hoisted
    avg = avg_ref[...]                               # (n_ways, n_batch), noise dtype

    def sq_diff(tt):
        x = noise_ref[tt]                            # (n_batch, tile_d), native dtype
        nproto = jnp.dot(avg, x, preferred_element_type=jnp.float32)   # MXU
        d = proto - nproto
        return d * d

    # Seed from the first t (no zeros+add pass); fori_loop bounds live ranges.
    partial = sq_diff(0)
    if t_block > 1:
        partial = jax.lax.fori_loop(
            1, t_block, lambda tt, p: p + sq_diff(tt), partial, unroll=unroll)

    if d_tiles == 1:
        # Single reduce + lane-dense store of this ti's partial sum.
        out_ref[...] = jnp.full(out_ref.shape, jnp.sum(partial), dtype=jnp.float32)
    else:
        acc_ref = acc[0]
        di = pl.program_id(1)

        @pl.when(di == 0)
        def _():
            acc_ref[...] = partial

        @pl.when(di > 0)
        def _():
            acc_ref[...] += partial

        @pl.when(di == d_tiles - 1)
        def _():
            out_ref[...] = jnp.full(out_ref.shape, jnp.sum(acc_ref[...]),
                                    dtype=jnp.float32)


def noise_proto_fix_loss(embedding, noise_embeddings, *, w, n_shots,
                         _block_budget_bytes=None):
    """JAX wrapper mirroring NoiseProtoFixLoss.forward.

    embedding:        (n_batch, dim)
    noise_embeddings: (random_times, n_batch, dim)
    Returns (scaled_loss, log_dict) like the PyTorch module.
    """
    n_batch, dim = embedding.shape
    random_times = noise_embeddings.shape[0]
    assert n_batch % n_shots == 0
    n_ways = n_batch // n_shots
    noise_dtype = noise_embeddings.dtype
    itemsize = jnp.dtype(noise_dtype).itemsize

    # Clean prototypes hoisted out of the kernel (computed once, tiny).
    proto = embedding.astype(jnp.float32).reshape(n_ways, n_shots, dim).mean(axis=1)

    # Per-shot averaging matrix in the *noise* dtype so the MXU consumes the noise
    # block natively (no per-step f32 upcast of the largest tensor).  NOTE: for bf16
    # inputs with non-power-of-two n_shots the 1/n_shots weight carries ~1e-3 rel.
    # error; squared diffs still accumulate in f32.
    rows = jax.lax.broadcasted_iota(jnp.int32, (n_ways, n_batch), 0)
    cols = jax.lax.broadcasted_iota(jnp.int32, (n_ways, n_batch), 1)
    avg = jnp.where(cols // n_shots == rows, 1.0 / n_shots, 0.0).astype(noise_dtype)

    cap = _vmem_capacity_bytes()
    block_budget = (int(_block_budget_bytes) if _block_budget_bytes is not None
                    else int(min(max(cap // 6, 8 << 20), 32 << 20)))

    tile_d = _pick_tile_d(dim, n_batch, itemsize, block_budget)
    d_tiles = dim // tile_d
    t_block = _pick_t_block(random_times, n_batch * tile_d * itemsize, block_budget)
    t_tiles = random_times // t_block

    # Padded (sublane x lane) VMEM footprints -> explicit scoped-VMEM limit.
    sub = max(8, 32 // itemsize)
    noise_blk = t_block * _round_up(n_batch, sub) * _round_up(tile_d, 128) * itemsize
    proto_blk = _round_up(n_ways, 8) * _round_up(tile_d, 128) * 4
    avg_blk = _round_up(n_ways, sub) * _round_up(n_batch, 128) * itemsize
    out_blk = 8 * 128 * 4
    acc_blk = (_round_up(n_ways, 8) * _round_up(tile_d, 128) * 4) if d_tiles > 1 else 0
    vmem_needed = 2 * (noise_blk + proto_blk + avg_blk + out_blk) + acc_blk
    vmem_limit = int(max(vmem_needed + (4 << 20), 16 << 20))
    vmem_limit = int(min(vmem_limit, cap - (8 << 20)))
    # TODO(synk): if dim % 128 != 0 forces a full-dim slab that still exceeds this
    # cap, pad dim to a multiple of 128 in the wrapper and re-tile instead.

    if d_tiles > 1:
        grid = (t_tiles, d_tiles)
        dims = ("parallel", "arbitrary")            # T across cores, dim = reduction
        avg_map = lambda ti, di: (0, 0)
        proto_map = lambda ti, di: (0, di)
        noise_map = lambda ti, di: (ti, 0, di)
        out_map = lambda ti, di: (ti, 0, 0)
        scratch = [pltpu.VMEM((n_ways, tile_d), jnp.float32)]
    else:
        grid = (t_tiles,)
        dims = ("parallel",)
        avg_map = lambda ti: (0, 0)
        proto_map = lambda ti: (0, 0)
        noise_map = lambda ti: (ti, 0, 0)
        out_map = lambda ti: (ti, 0, 0)
        scratch = []

    kernel = functools.partial(
        _noise_proto_fix_kernel,
        t_block=t_block, d_tiles=d_tiles, unroll=min(4, max(1, t_block - 1)))

    out = pl.pallas_call(
        kernel,
        out_shape=jax.ShapeDtypeStruct((t_tiles, 8, 128), jnp.float32),
        grid_spec=pltpu.PrefetchScalarGridSpec(
            num_scalar_prefetch=0,
            grid=grid,
            in_specs=[
                pl.BlockSpec((n_ways, n_batch), avg_map),             # avg matrix
                pl.BlockSpec((n_ways, tile_d), proto_map),            # clean prototypes
                pl.BlockSpec((t_block, n_batch, tile_d), noise_map),  # noise slab
            ],
            out_specs=pl.BlockSpec((1, 8, 128), out_map),             # per-ti partial
            scratch_shapes=scratch,
        ),
        compiler_params=pltpu.CompilerParams(
            dimension_semantics=dims,
            vmem_limit_bytes=vmem_limit,
        ),
    )(avg, proto, noise_embeddings)

    # Per-ti partial sums -> unscaled loss: sum over (t, ways, dim) / (n_ways * T).
    unscaled = out[:, 0, 0].sum() / jnp.float32(n_ways * random_times)
    loss = unscaled * jnp.float32(w)
    log = {"NoiseProtoFixLoss": unscaled}
    return loss, log


def _reference(embedding, noise_embeddings, w, n_shots):
    n_batch, dim = embedding.shape
    n_ways = n_batch // n_shots
    random_times = noise_embeddings.shape[0]
    protos = embedding.reshape(n_ways, n_shots, dim).mean(axis=1)
    total = 0.0
    for t in range(random_times):
        nprotos = noise_embeddings[t].reshape(n_ways, n_shots, dim).mean(axis=1)
        total += ((protos - nprotos) ** 2).sum(axis=1).mean()
    unscaled = total / random_times
    return unscaled * w, unscaled


if __name__ == "__main__":
    key = jax.random.PRNGKey(0)

    # --- Check 1: small shapes, full-dim (1-D grid, "parallel" T axis) -----------
    n_ways, n_shots, dim, random_times = 4, 2, 32, 3
    n_batch = n_ways * n_shots
    w = 0.5
    k1, k2, k3, k4 = jax.random.split(key, 4)
    embedding = jax.random.normal(k1, (n_batch, dim), dtype=jnp.float32)
    noise_embeddings = embedding[None] + 0.1 * jax.random.normal(
        k2, (random_times, n_batch, dim), dtype=jnp.float32)

    loss, log = noise_proto_fix_loss(embedding, noise_embeddings, w=w, n_shots=n_shots)
    loss = jax.block_until_ready(loss)
    ref_scaled, ref_unscaled = _reference(embedding, noise_embeddings, w, n_shots)
    assert jnp.allclose(loss, ref_scaled, rtol=1e-5, atol=1e-6), (loss, ref_scaled)
    assert jnp.allclose(log["NoiseProtoFixLoss"], ref_unscaled, rtol=1e-5, atol=1e-6)

    # --- Check 2: force the tiled-dim / 2-D grid accumulator path ----------------
    dim2, random_times2 = 256, 4
    embedding2 = jax.random.normal(k3, (n_batch, dim2), dtype=jnp.float32)
    noise_embeddings2 = embedding2[None] + 0.1 * jax.random.normal(
        k4, (random_times2, n_batch, dim2), dtype=jnp.float32)

    loss2, log2 = noise_proto_fix_loss(
        embedding2, noise_embeddings2, w=w, n_shots=n_shots,
        _block_budget_bytes=4096)   # tiny budget -> tile_d=128, d_tiles=2, t_tiles=4
    loss2 = jax.block_until_ready(loss2)
    ref_scaled2, ref_unscaled2 = _reference(embedding2, noise_embeddings2, w, n_shots)
    assert jnp.allclose(loss2, ref_scaled2, rtol=1e-5, atol=1e-6), (loss2, ref_scaled2)
    assert jnp.allclose(log2["NoiseProtoFixLoss"], ref_unscaled2, rtol=1e-5, atol=1e-6)

    print("KERNEL_OK")
</pallas_src>

<mosaic_0001>
module attributes {stable_mosaic.version = 11 : i64} {
  func.func @_noise_proto_fix_kernel(%arg0: i32, %arg1: memref<4x8xf32, #tpu.memory_space<vmem>>, %arg2: memref<4x32xf32, #tpu.memory_space<vmem>>, %arg3: memref<1x8x32xf32, #tpu.memory_space<vmem>>, %arg4: memref<1x8x128xf32, #tpu.memory_space<vmem>>) attributes {dimension_semantics = [#tpu.dimension_semantics<parallel>], iteration_bounds = array<i64: 3>, scalar_prefetch = 0 : i64, scratch_operands = 0 : i64, tpu.core_type = #tpu.core_type<tc>, window_params = [{pipeline_mode = #tpu.pipeline_mode<synchronous>, transform_indices = @transform_0, window_bounds = array<i64: 4, 8>}, {pipeline_mode = #tpu.pipeline_mode<synchronous>, transform_indices = @transform_1, window_bounds = array<i64: 4, 32>}, {transform_indices = @transform_2, window_bounds = array<i64: 1, 8, 32>}, {transform_indices = @transform_3, window_bounds = array<i64: 1, 8, 128>}]} {
    %c0 = arith.constant 0 : index
    %c0_0 = arith.constant 0 : index
    %0 = vector.load %arg2[%c0, %c0_0] : memref<4x32xf32, #tpu.memory_space<vmem>>, vector<4x32xf32>
    %c0_1 = arith.constant 0 : index
    %c0_2 = arith.constant 0 : index
    %1 = vector.load %arg1[%c0_1, %c0_2] : memref<4x8xf32, #tpu.memory_space<vmem>>, vector<4x8xf32>
    %c0_3 = arith.constant 0 : index
    %c0_4 = arith.constant 0 : index
    %c0_5 = arith.constant 0 : index
    %2 = vector.load %arg3[%c0_3, %c0_4, %c0_5] : memref<1x8x32xf32, #tpu.memory_space<vmem>>, vector<1x8x32xf32>
    %3 = vector.shape_cast %2 : vector<1x8x32xf32> to vector<8x32xf32>
    %cst = arith.constant dense<0.000000e+00> : vector<4x32xf32>
    %4 = tpu.matmul %1, %3, %cst {dimension_numbers = #tpu.dot_dimension_numbers<[1], [0], [0], [1], [0, 0, 1, 1], [], []>} : vector<4x8xf32>, vector<8x32xf32>, vector<4x32xf32> -> vector<4x32xf32>
    %5 = arith.subf %0, %4 : vector<4x32xf32>
    %6 = arith.mulf %5, %5 : vector<4x32xf32>
    %7 = vector.shape_cast %6 : vector<4x32xf32> to vector<1x4x32xf32>
    %cst_6 = arith.constant dense<0.000000e+00> : vector<1xf32>
    %8 = vector.multi_reduction <add>, %7, %cst_6 [1, 2] : vector<1x4x32xf32> to vector<1xf32>
    %9 = vector.shape_cast %8 : vector<1xf32> to vector<1x1x1xf32>
    %10 = vector.extract %9[0, 0, 0] : f32 from vector<1x1x1xf32>
    %11 = vector.broadcast %10 : f32 to vector<1x8x128xf32>
    %c0_7 = arith.constant 0 : index
    %c0_8 = arith.constant 0 : index
    %c0_9 = arith.constant 0 : index
    %12 = vector.load %arg4[%c0_7, %c0_8, %c0_9] : memref<1x8x128xf32, #tpu.memory_space<vmem>>, vector<1x8x128xf32>
    tpu.vector_store %arg4[%c0_7, %c0_8, %c0_9], %11 {strides = array<i32>} : memref<1x8x128xf32, #tpu.memory_space<vmem>>, vector<1x8x128xf32>,
    return
  }
  func.func @transform_0(%arg0: i32) -> (i32, i32) {
    %c0_i32 = arith.constant 0 : i32
    %c0_i32_0 = arith.constant 0 : i32
    %c0_i32_1 = arith.constant 0 : i32
    return %c0_i32, %c0_i32_0 : i32, i32
  }
  func.func @transform_1(%arg0: i32) -> (i32, i32) {
    %c0_i32 = arith.constant 0 : i32
    %c0_i32_0 = arith.constant 0 : i32
    %c0_i32_1 = arith.constant 0 : i32
    return %c0_i32, %c0_i32_0 : i32, i32
  }
  func.func @transform_2(%arg0: i32) -> (i32, i32, i32) {
    %c0_i32 = arith.constant 0 : i32
    %c0_i32_0 = arith.constant 0 : i32
    %c0_i32_1 = arith.constant 0 : i32
    return %arg0, %c0_i32, %c0_i32_0 : i32, i32, i32
  }
  func.func @transform_3(%arg0: i32) -> (i32, i32, i32) {
    %c0_i32 = arith.constant 0 : i32
    %c0_i32_0 = arith.constant 0 : i32
    %c0_i32_1 = arith.constant 0 : i32
    return %arg0, %c0_i32, %c0_i32_0 : i32, i32, i32
  }
}

</mosaic_0001>

<llo_original>
// kernel: tpu_custom_call.1
$region0: #{tpu_custom_call.1}
  #allocation0 [shape = 'u32[]', space=smem, size = 0x4, offset = 0x4, fixed_abs, tag = 'smem constant byte address 0x4 - core index']
  #allocation1 [shape = 'u32[72,128]{1,0:T(1,128)}', space=vmem, size = 0x9000, scoped, tag = 'internal scratch']
  %s0 = inlined_call_operand.hbm [shape: f32[4,8], index: 0, kind: input, shape index: {}]
  %s1 = inlined_call_operand.hbm [shape: f32[4,32], index: 1, kind: input, shape index: {}]
  %s2 = inlined_call_operand.hbm [shape: f32[3,8,32], index: 2, kind: input, shape index: {}]
  %s3 = inlined_call_operand.hbm [shape: f32[3,8,128], index: 3, kind: output, shape index: {}]
  %s4 = sld [smem:[#allocation0]]
  $region57: #{tpu_custom_call.1} parent=0
    _
  %s6 = ssub.s32 1, %s4
  %s7 = scalar_select 0, %s6, %s4
  $region1: #{tpu_custom_call.1} parent=0
    #allocation2 [shape = 'u8[2048]{0}', space=vmem, size = 0x800, scoped, tag = 'input window, operand 0, single buffered']
    #allocation3 [shape = 's32[2]{0}', space=sflag, size = 0x8, scoped, tag = 'scoped memory for tpu_custom_call.1']
    #allocation4 [shape = 's32[2]{0}', space=sflag, size = 0x8, scoped, tag = 'scoped memory for tpu_custom_call.1']
    #allocation5 [shape = 'u8[2048]{0}', space=vmem, size = 0x800, scoped, tag = 'input window, operand 1, single buffered']
    #allocation6 [shape = 's32[1]{0}', space=sflag, size = 0x4, scoped, tag = 'scoped memory for tpu_custom_call.1']
    #allocation7 [shape = 'u8[8192]{0}', space=vmem, size = 0x2000, scoped, tag = 'input window, operand 2']
    #allocation8 [shape = 'u8[8192]{0}', space=vmem, size = 0x2000, scoped, tag = 'output window, operand 0']
    %8 = vsyncpa [#allocation3], 0
    %9 = vsyncpa [#allocation6], 0
    %10 = vsyncpa [#allocation4], 0
    %s11 = scalar_lea.sflag [#allocation4], 1
    %12 = vsyncpa %s11, 0
    loop: start=0, step=1, limit=5
    $region2: #{tpu_custom_call.1} parent=1 // loop_pre_header
      _
    $region3: #{tpu_custom_call.1} parent=1 // loop_header
      %s14 = sphi 0, %s18
      %p15 = scmp.ge.s32.totalorder %s14, 5
      %s22 = sphi 0, %s22
      %s24 = sphi 0, %s22
      %s25 = sphi 0, %s24
      %s39 = sphi 0, %s25
      %s43 = sphi 0, %s43
      %s45 = sphi 0, %s43
      %s46 = sphi 0, %s45
      %s60 = sphi 0, %s46
      %s66 = sphi 0, %s68
      %s69 = sphi 0, %s66
      %s70 = sphi 0, %s69
      %s86 = sphi 0, %s70
      %s92 = sphi 0, %s94
      %s95 = sphi 0, %s92
      %s96 = sphi 0, %s95
      %s112 = sphi 0, %s96
    $region4: #{tpu_custom_call.1} parent=1 // loop_header_branch
      %17 = sbr.rel (%p15) target = $region8
    $region5: #{tpu_custom_call.1} parent=1 // loop_body
      %s19 = ssub.s32 %s14, 1
      %s20 = ssub.s32 %s14, 2
      %s21 = sadd.s32 %s14, 1
      %s23 = sadd.s32 %s22, 1
      %p26 = scmp.eq.s32.totalorder %s14, 2
      %p27 = scmp.ne.s32.totalorder %s22, %s24
      %p28 = scmp.eq.s32.totalorder %s14, 0
      %p29 = por %p27, %p28
      %p30 = scmp.ne.s32.totalorder %s22, %s24
      %p31 = scmp.eq.s32.totalorder %s19, 2
      %p32 = por %p30, %p31
      %p33 = scmp.ne.s32.totalorder %s24, %s25
      %p34 = scmp.eq.s32.totalorder %s19, 0
      %p35 = por %p33, %p34
      %p36 = scmp.ne.s32.totalorder %s24, %s25
      %p37 = scmp.eq.s32.totalorder %s20, 2
      %p38 = por %p36, %p37
      %p40 = scmp.ne.s32.totalorder %s25, %s39
      %p41 = scmp.eq.s32.totalorder %s20, 0
      %p42 = por %p40, %p41
      %s44 = sadd.s32 %s43, 1
      %p47 = scmp.eq.s32.totalorder %s14, 2
      %p48 = scmp.ne.s32.totalorder %s43, %s45
      %p49 = scmp.eq.s32.totalorder %s14, 0
      %p50 = por %p48, %p49
      %p51 = scmp.ne.s32.totalorder %s43, %s45
      %p52 = scmp.eq.s32.totalorder %s19, 2
      %p53 = por %p51, %p52
      %p54 = scmp.ne.s32.totalorder %s45, %s46
      %p55 = scmp.eq.s32.totalorder %s19, 0
      %p56 = por %p54, %p55
      %p57 = scmp.ne.s32.totalorder %s45, %s46
      %p58 = scmp.eq.s32.totalorder %s20, 2
      %p59 = por %p57, %p58
      %p61 = scmp.ne.s32.totalorder %s46, %s60
      %p62 = scmp.eq.s32.totalorder %s20, 0
      %p63 = por %p61, %p62
      %s64 = ssub.s32 %s14, %s21
      %p65 = scmp.eq.s32.totalorder %s64, 0
      %s67 = sadd.s32 %s66, 1
      %s68 = scalar_select %p65, %s66, %s67
      %p71 = pneg %p65
      %p72 = scmp.eq.s32.totalorder %s14, 2
      %p73 = por %p71, %p72
      %p74 = scmp.ne.s32.totalorder %s66, %s69
      %p75 = scmp.eq.s32.totalorder %s14, 0
      %p76 = por %p74, %p75
      %p77 = scmp.ne.s32.totalorder %s66, %s69
      %p78 = scmp.eq.s32.totalorder %s19, 2
      %p79 = por %p77, %p78
      %p80 = scmp.ne.s32.totalorder %s69, %s70
      %p81 = scmp.eq.s32.totalorder %s19, 0
      %p82 = por %p80, %p81
      %p83 = scmp.ne.s32.totalorder %s69, %s70
      %p84 = scmp.eq.s32.totalorder %s20, 2
      %p85 = por %p83, %p84
      %p87 = scmp.ne.s32.totalorder %s70, %s86
      %p88 = scmp.eq.s32.totalorder %s20, 0
      %p89 = por %p87, %p88
      %s90 = ssub.s32 %s14, %s21
      %p91 = scmp.eq.s32.totalorder %s90, 0
      %s93 = sadd.s32 %s92, 1
      %s94 = scalar_select %p91, %s92, %s93
      %p97 = pneg %p91
      %p98 = scmp.eq.s32.totalorder %s14, 2
      %p99 = por %p97, %p98
      %p100 = scmp.ne.s32.totalorder %s92, %s95
      %p101 = scmp.eq.s32.totalorder %s14, 0
      %p102 = por %p100, %p101
      %p103 = scmp.ne.s32.totalorder %s92, %s95
      %p104 = scmp.eq.s32.totalorder %s19, 2
      %p105 = por %p103, %p104
      %p106 = scmp.ne.s32.totalorder %s95, %s96
      %p107 = scmp.eq.s32.totalorder %s19, 0
      %p108 = por %p106, %p107
      %p109 = scmp.ne.s32.totalorder %s95, %s96
      %p110 = scmp.eq.s32.totalorder %s20, 2
      %p111 = por %p109, %p110
      %p113 = scmp.ne.s32.totalorder %s96, %s112
      %p114 = scmp.eq.s32.totalorder %s20, 0
      %p115 = por %p113, %p114
      %p116 = scmp.le.s32.totalorder 1, %s14
      %p117 = scmp.lt.s32.totalorder %s14, 4
      %p118 = pnand %p116, %p117
      %p119 = pneg %p118
      // Predicated region
      $region9: #{tpu_custom_call.1} parent=5 // pred_check
        _
      $region10: #{tpu_custom_call.1} parent=5 // pred_check_branch
        %121 = sbr.rel (%p118) target = $region12
      $region11: #{tpu_custom_call.1} parent=5 // pred_region
        %s122 = ssub.s32 %s14, 1
        // Predicated region
        $region13: #{tpu_custom_call.1} parent=11 // pred_check
          %p123 = pneg %p35
        $region14: #{tpu_custom_call.1} parent=11 // pred_check_branch
          %125 = sbr.rel (%p123) target = $region16
        $region15: #{tpu_custom_call.1} parent=11 // pred_region
          %127 = vsyncadd [#allocation3], 0
          %s129 = sshll.u32 %s0, 4
          %s130 = int_to_ptr.hbm [resolvable:$true] %s129
          %s131 = sshll.u32 [#allocation2], 4
          %s132 = int_to_ptr.vmem [resolvable:$true] %s131
          %134 = dma.hbm_to_vmem [thread:$0]  %s130, 64, %s132, [#allocation3]
        $region16: #{tpu_custom_call.1} parent=11 // pred_fallthru
          _
        // Predicated region
        $region17: #{tpu_custom_call.1} parent=11 // pred_check
          %p135 = pneg %p56
        $region18: #{tpu_custom_call.1} parent=11 // pred_check_branch
          %137 = sbr.rel (%p135) target = $region20
        $region19: #{tpu_custom_call.1} parent=11 // pred_region
          %139 = vsyncadd [#allocation6], 0
          %s141 = sshll.u32 %s1, 4
          %s142 = int_to_ptr.hbm [resolvable:$true] %s141
          %s143 = sshll.u32 [#allocation5], 4
          %s144 = int_to_ptr.vmem [resolvable:$true] %s143
          %146 = dma.hbm_to_vmem [thread:$0]  %s142, 64, %s144, [#allocation6]
        $region20: #{tpu_custom_call.1} parent=11 // pred_fallthru
          _
      $region12: #{tpu_custom_call.1} parent=5 // pred_fallthru
        _
      %p147 = scmp.lt.s32.totalorder %s14, 3
      // Predicated region
      $region21: #{tpu_custom_call.1} parent=5 // pred_check
        %p148 = pneg %p147
      $region22: #{tpu_custom_call.1} parent=5 // pred_check_branch
        %150 = sbr.rel (%p148) target = $region24
      $region23: #{tpu_custom_call.1} parent=5 // pred_region
        // Predicated region
        $region25: #{tpu_custom_call.1} parent=23 // pred_check
          %p151 = pneg %p76
        $region26: #{tpu_custom_call.1} parent=23 // pred_check_branch
          %153 = sbr.rel (%p151) target = $region28
        $region27: #{tpu_custom_call.1} parent=23 // pred_region
          %s154 = sand.u32 %s14, 1
          %s155 = scalar_lea.sflag [#allocation3], %s154
          %s156 = sand.u32 %s66, 1
          %s157 = smul.addr %s156, 8
          %s158 = scalar_lea.vmem [#allocation7], %s157
          %160 = vsyncadd %s155, 0
          %s161 = smul.addr %s14, 8
          %s162 = scalar_lea.hbm %s2, %s161
          %s164 = sshll.u32 %s162, 4
          %s165 = int_to_ptr.hbm [resolvable:$true] %s164
          %s166 = sshll.u32 %s158, 4
          %s167 = int_to_ptr.vmem [resolvable:$true] %s166
          %169 = dma.hbm_to_vmem [thread:$0]  %s165, 128, %s167, %s155
        $region28: #{tpu_custom_call.1} parent=23 // pred_fallthru
          _
      $region24: #{tpu_custom_call.1} parent=5 // pred_fallthru
        _
      %p170 = scmp.le.s32.totalorder 1, %s14
      %p171 = scmp.lt.s32.totalorder %s14, 4
      %p172 = pnand %p170, %p171
      %p173 = pneg %p172
      // Predicated region
      $region29: #{tpu_custom_call.1} parent=5 // pred_check
        _
      $region30: #{tpu_custom_call.1} parent=5 // pred_check_branch
        %175 = sbr.rel (%p172) target = $region32
      $region31: #{tpu_custom_call.1} parent=5 // pred_region
        %s176 = ssub.s32 %s14, 1
        // Predicated region
        $region33: #{tpu_custom_call.1} parent=31 // pred_check
          %p177 = pneg %p35
        $region34: #{tpu_custom_call.1} parent=31 // pred_check_branch
          %179 = sbr.rel (%p177) target = $region36
        $region35: #{tpu_custom_call.1} parent=31 // pred_region
          %181 = dma.done [#allocation3], 64
        $region36: #{tpu_custom_call.1} parent=31 // pred_fallthru
          _
        // Predicated region
        $region37: #{tpu_custom_call.1} parent=31 // pred_check
          %p182 = pneg %p56
        $region38: #{tpu_custom_call.1} parent=31 // pred_check_branch
          %184 = sbr.rel (%p182) target = $region40
        $region39: #{tpu_custom_call.1} parent=31 // pred_region
          %186 = dma.done [#allocation6], 64
        $region40: #{tpu_custom_call.1} parent=31 // pred_fallthru
          _
        %s187 = sand.u32 %s19, 1
        %s188 = scalar_lea.sflag [#allocation3], %s187
        %s189 = sand.u32 %s69, 1
        %s190 = smul.addr %s189, 8
        %s191 = scalar_lea.vmem [#allocation7], %s190
        // Predicated region
        $region41: #{tpu_custom_call.1} parent=31 // pred_check
          %p192 = pneg %p82
        $region42: #{tpu_custom_call.1} parent=31 // pred_check_branch
          %194 = sbr.rel (%p192) target = $region44
        $region43: #{tpu_custom_call.1} parent=31 // pred_region
          %196 = dma.done %s188, 128
        $region44: #{tpu_custom_call.1} parent=31 // pred_fallthru
          _
        %p197 = pneg %p35
        %p198 = pneg %p32
        %p199 = pneg %p56
        %p200 = pneg %p53
        %s201 = sand.u32 %s19, 1
        %s202 = scalar_lea.sflag [#allocation3], %s201
        %s203 = sand.u32 %s69, 1
        %s204 = smul.addr %s203, 8
        %s205 = scalar_lea.vmem [#allocation7], %s204
        %p206 = pneg %p82
        %p207 = pneg %p79
        %p208 = pneg %p108
        %p209 = pneg %p105
        %s210 = sand.u32 %s95, 1
        %s211 = scalar_lea.sflag [#allocation4], %s210
        %s212 = sand.u32 %s95, 1
        %s213 = smul.addr %s212, 8
        %s214 = scalar_lea.vmem [#allocation8], %s213
        %v215 = vld [vmem:[#allocation5] sm:$0xf]
        %v216 = vld [vmem:[#allocation2] sm:$0xf]
        %v217 = vld [vmem:[%s191] sm:$0xff]
        %vm218 = vcmask 64512
        %v220 = vsel %vm218, %v216, 0
        %222 = vmatpush.msra.mxu0 0.0
        %223 = vmatpush.msra.mxu0 0.0
        %224 = vmatpush.msra.mxu0 0.0
        %225 = vmatpush.msra.mxu0 0.0
        %226 = vmatpush.msra.mxu0 0.0
        %227 = vmatpush.msra.mxu0 0.0
        %228 = vmatpush.msra.mxu0 0.0
        %229 = vmatpush.msra.mxu0 0.0
        %230 = vmatpush.msra.mxu0 0.0
        %231 = vmatpush.msra.mxu0 0.0
        %232 = vmatpush.msra.mxu0 0.0
        %233 = vmatpush.msra.mxu0 0.0
        %234 = vmatpush.msra.mxu0 0.0
        %235 = vmatpush.msra.mxu0 0.0
        %236 = vmatpush.msra.mxu0 0.0
        %237 = vmatpush.msra.mxu0 %v217
        %238 = vmatmul.f32.gmra.mxu0 %v220
        %v239 = vpop.f32.mrf.mxu0
        %v240 = vadd.f32 0.0, %v239
        %241 = vdwg.mxu0
        %v242 = vsub.f32 %v215, %v240
        %v243 = vmul.f32 %v242, %v242
        %vm244 = vcmask 257024
        %v245 = vsel %vm244, %v243, 0.0
        %246 = vadd.xlane.f32.xlu0 %v245
        %v247 = vpop.xlane.xlu0 %246
        %v248 = vrot.slane %v247, 4
        %v249 = vadd.f32 %v247, %v248
        %v250 = vrot.slane %v249, 2
        %v251 = vadd.f32 %v249, %v250
        %v252 = vrot.slane %v251, 1
        %v253 = vadd.f32 %v251, %v252
        %s254 = vtos %v253
        %v255 = vstv %s254
        %256 = vst [vmem:[%s214] sm:$0xff] %v255
        %s257 = sand.u32 %s95, 1
        %s258 = scalar_lea.sflag [#allocation4], %s257
        %s259 = sand.u32 %s95, 1
        %s260 = smul.addr %s259, 8
        %s261 = scalar_lea.vmem [#allocation8], %s260
        // Predicated region
        $region45: #{tpu_custom_call.1} parent=31 // pred_check
          %p262 = pneg %p105
        $region46: #{tpu_custom_call.1} parent=31 // pred_check_branch
          %264 = sbr.rel (%p262) target = $region48
        $region47: #{tpu_custom_call.1} parent=31 // pred_region
          %266 = vsyncadd %s258, 0
          %s267 = smul.addr %s19, 8
          %s268 = scalar_lea.hbm %s3, %s267
          %s270 = sshll.u32 %s261, 4
          %s271 = int_to_ptr.vmem [resolvable:$true] %s270
          %s272 = sshll.u32 %s268, 4
          %s273 = int_to_ptr.hbm [resolvable:$true] %s272
          %275 = dma.vmem_to_hbm [thread:$0]  %s271, 128, %s273, %s258
        $region48: #{tpu_custom_call.1} parent=31 // pred_fallthru
          _
      $region32: #{tpu_custom_call.1} parent=5 // pred_fallthru
        _
      %p276 = scmp.le.s32.totalorder 2, %s14
      // Predicated region
      $region49: #{tpu_custom_call.1} parent=5 // pred_check
        %p277 = pneg %p276
      $region50: #{tpu_custom_call.1} parent=5 // pred_check_branch
        %279 = sbr.rel (%p277) target = $region52
      $region51: #{tpu_custom_call.1} parent=5 // pred_region
        %s280 = ssub.s32 %s14, 2
        // Predicated region
        $region53: #{tpu_custom_call.1} parent=51 // pred_check
          %p281 = pneg %p111
        $region54: #{tpu_custom_call.1} parent=51 // pred_check_branch
          %283 = sbr.rel (%p281) target = $region56
        $region55: #{tpu_custom_call.1} parent=51 // pred_region
          %s284 = sand.u32 %s96, 1
          %s285 = scalar_lea.sflag [#allocation4], %s284
          %s286 = sand.u32 %s96, 1
          %s287 = smul.addr %s286, 8
          %s288 = scalar_lea.vmem [#allocation8], %s287
          %290 = dma.done %s285, 128
        $region56: #{tpu_custom_call.1} parent=51 // pred_fallthru
          _
      $region52: #{tpu_custom_call.1} parent=5 // pred_fallthru
        _
    $region6: #{tpu_custom_call.1} parent=1 // loop_footer
      %s18 = sadd.s32 1, %s14
    $region7: #{tpu_custom_call.1} parent=1 // loop_footer_branch
      %13 = sbr.rel target = $region3
    $region8: #{tpu_custom_call.1} parent=1 // loop_exit
      _
    %291 = vsyncpa [#allocation3], 1
    %s292 = scalar_lea.sflag [#allocation3], 1
    %293 = vsyncpa %s292, 1
    %294 = vsyncpa [#allocation6], 1
    %295 = vsyncpa [#allocation4], 1
    %s296 = scalar_lea.sflag [#allocation4], 1
    %297 = vsyncpa %s296, 1

</llo_original>
